<compile_context>
chip_gen: v7x
topology: tpu7x:2x2x1
jax: 0.10.0
libtpu: 0.0.40
codegen_flags: <defaults>
</compile_context>

<pallas_src>
import jax
import jax.numpy as jnp
from jax import lax
from jax.experimental import pallas as pl
from jax.experimental.pallas import tpu as pltpu

IN_FEATURES = 4
HIDDEN = 256
OUT_FEATURES = 1
# Batch-lane tile: [TB, 256] f32 hidden temp = 8 MiB -> fits the 32 MiB VMEM budget on
# v5e/v6e/v7x with double-buffered x/out tiles.  Tunable per generation (v5e/v6e can
# take 16K-32K with vmem_limit_bytes raised accordingly).
MAX_TB = 8192


def _mlp_kernel(x_ref, w1_ref, b1_ref, w2t_ref, b2_ref, o_ref):
    """One batch tile.

    x_ref  : [TB, 4]    input tile, native layout (no wrapper transpose/pad)
    w1_ref : [4, 256]   fc1 weight (fc1(x) == x @ w1 + b1), VMEM-resident
    b1_ref : [1, 256]   fc1 bias row
    w2t_ref: [1, 256]   fc2 weight row (w2 transposed)
    b2_ref : [1, 1]     fc2 bias
    o_ref  : [1, TB]    sigmoid output, batch on lanes (lane-dense, unmasked stores)
    """
    # fc1 on the MXU: [TB,4] @ [4,256] -> [TB,256], f32 accumulate.
    h = jnp.dot(x_ref[...], w1_ref[...], preferred_element_type=jnp.float32)
    # Bias + single ReLU (the reference applies ReLU twice; it is idempotent).
    h = jnp.maximum(h + b1_ref[...], 0.0)
    # fc2 on the MXU as an NT contraction over the hidden dim:
    #   [1,256] . [TB,256]^T -> [1,TB]
    # Logits land directly in the lane-dense output layout; the 256-wide reduction
    # stays off the VPU (only bias+ReLU above are VALU work).
    logit = lax.dot_general(
        w2t_ref[...], h, (((1,), (1,)), ((), ())),
        preferred_element_type=jnp.float32,
    )
    logit = logit + b2_ref[...]
    # Exact sigmoid: logit is only [1, TB], so exp + true divide is negligible and
    # matches torch.sigmoid (no approx-reciprocal error).
    o_ref[...] = 1.0 / (1.0 + jnp.exp(-logit))


def salary_predictor_forward(x, w1, b1, w2, b2):
    """Forward pass of Salary_Predictor.

    x : [B, 4] f32
    w1: [4, 256], b1: [256]   (layout such that torch fc1(x) == x @ w1 + b1)
    w2: [256, 1], b2: [1]
    returns [B, 1] f32
    """
    B = x.shape[0]
    # Whole batch as one tile when small (every block dim == full array dim, so any
    # unaligned B is legal); otherwise MAX_TB lanes per grid step with a ragged,
    # mask-stored final block.
    TB = B if B <= MAX_TB else MAX_TB
    n_tiles = pl.cdiv(B, TB)

    # Tiny parameter reshapes only — no transpose/pad of the activation tensor.
    b1r = b1.reshape(1, HIDDEN)
    w2t = w2.reshape(1, HIDDEN)          # [256,1] -> [1,256] (free: one dim is 1)
    b2r = b2.reshape(1, 1)

    out = pl.pallas_call(
        _mlp_kernel,
        out_shape=jax.ShapeDtypeStruct((OUT_FEATURES, B), jnp.float32),
        grid_spec=pltpu.PrefetchScalarGridSpec(
            num_scalar_prefetch=0,
            grid=(n_tiles,),
            in_specs=[
                pl.BlockSpec((TB, IN_FEATURES), lambda i: (i, 0)),       # x tile (streamed)
                pl.BlockSpec((IN_FEATURES, HIDDEN), lambda i: (0, 0)),   # w1   (resident)
                pl.BlockSpec((1, HIDDEN), lambda i: (0, 0)),             # b1   (resident)
                pl.BlockSpec((1, HIDDEN), lambda i: (0, 0)),             # w2^T (resident)
                pl.BlockSpec((1, 1), lambda i: (0, 0)),                  # b2   (resident)
            ],
            out_specs=pl.BlockSpec((OUT_FEATURES, TB), lambda i: (0, i)),
        ),
        compiler_params=pltpu.CompilerParams(
            dimension_semantics=("parallel",),       # batch tiles shard across TCs on v7x
            vmem_limit_bytes=32 * 1024 * 1024,
        ),
    )(x, w1, b1r, w2t, b2r)

    # [1, B] -> [B, 1]: one dim is 1, so this transpose is a free reshape.
    return out.reshape(B, OUT_FEATURES)


if __name__ == "__main__":
    key = jax.random.PRNGKey(0)
    kx, k1, k2, k3, k4 = jax.random.split(key, 5)

    B = 8
    x = jax.random.normal(kx, (B, IN_FEATURES), jnp.float32)

    # torch.nn.Linear-style uniform init
    bound1 = 1.0 / (IN_FEATURES ** 0.5)
    bound2 = 1.0 / (HIDDEN ** 0.5)
    w1 = jax.random.uniform(k1, (IN_FEATURES, HIDDEN), jnp.float32, -bound1, bound1)
    b1 = jax.random.uniform(k2, (HIDDEN,), jnp.float32, -bound1, bound1)
    w2 = jax.random.uniform(k3, (HIDDEN, OUT_FEATURES), jnp.float32, -bound2, bound2)
    b2 = jax.random.uniform(k4, (OUT_FEATURES,), jnp.float32, -bound2, bound2)

    out = salary_predictor_forward(x, w1, b1, w2, b2)
    out = jax.block_until_ready(out)

    # Pure-JAX reference of the torch forward (fc1 -> relu -> relu -> fc2 -> sigmoid)
    h = jnp.maximum(x @ w1 + b1[None, :], 0.0)
    h = jnp.maximum(h, 0.0)
    ref = jax.nn.sigmoid(h @ w2 + b2[None, :])

    assert out.shape == (B, OUT_FEATURES), out.shape
    err = float(jnp.max(jnp.abs(out - ref)))
    assert jnp.allclose(out, ref, atol=1e-5, rtol=1e-5), (
        f"mismatch vs reference, max abs err {err}")

    print("KERNEL_OK")
</pallas_src>

<mosaic_0001>
module attributes {stable_mosaic.version = 11 : i64} {
  func.func @_mlp_kernel(%arg0: i32, %arg1: memref<8x4xf32, #tpu.memory_space<vmem>>, %arg2: memref<4x256xf32, #tpu.memory_space<vmem>>, %arg3: memref<1x256xf32, #tpu.memory_space<vmem>>, %arg4: memref<1x256xf32, #tpu.memory_space<vmem>>, %arg5: memref<1x1xf32, #tpu.memory_space<vmem>>, %arg6: memref<1x8xf32, #tpu.memory_space<vmem>>) attributes {dimension_semantics = [#tpu.dimension_semantics<parallel>], iteration_bounds = array<i64: 1>, scalar_prefetch = 0 : i64, scratch_operands = 0 : i64, tpu.core_type = #tpu.core_type<tc>, window_params = [{transform_indices = @transform_0, window_bounds = array<i64: 8, 4>}, {pipeline_mode = #tpu.pipeline_mode<synchronous>, transform_indices = @transform_1, window_bounds = array<i64: 4, 256>}, {pipeline_mode = #tpu.pipeline_mode<synchronous>, transform_indices = @transform_2, window_bounds = array<i64: 1, 256>}, {pipeline_mode = #tpu.pipeline_mode<synchronous>, transform_indices = @transform_3, window_bounds = array<i64: 1, 256>}, {pipeline_mode = #tpu.pipeline_mode<synchronous>, transform_indices = @transform_4, window_bounds = array<i64: 1, 1>}, {transform_indices = @transform_5, window_bounds = array<i64: 1, 8>}]} {
    %c0 = arith.constant 0 : index
    %c0_0 = arith.constant 0 : index
    %0 = vector.load %arg1[%c0, %c0_0] : memref<8x4xf32, #tpu.memory_space<vmem>>, vector<8x4xf32>
    %c0_1 = arith.constant 0 : index
    %c0_2 = arith.constant 0 : index
    %1 = vector.load %arg2[%c0_1, %c0_2] : memref<4x256xf32, #tpu.memory_space<vmem>>, vector<4x256xf32>
    %cst = arith.constant dense<0.000000e+00> : vector<8x256xf32>
    %2 = tpu.matmul %0, %1, %cst {dimension_numbers = #tpu.dot_dimension_numbers<[1], [0], [0], [1], [0, 0, 1, 1], [], []>} : vector<8x4xf32>, vector<4x256xf32>, vector<8x256xf32> -> vector<8x256xf32>
    %c0_3 = arith.constant 0 : index
    %c0_4 = arith.constant 0 : index
    %3 = vector.load %arg3[%c0_3, %c0_4] : memref<1x256xf32, #tpu.memory_space<vmem>>, vector<1x256xf32>
    %4 = vector.broadcast %3 : vector<1x256xf32> to vector<8x256xf32>
    %5 = arith.addf %2, %4 : vector<8x256xf32>
    %cst_5 = arith.constant 0.000000e+00 : f32
    %6 = vector.broadcast %cst_5 : f32 to vector<8x256xf32>
    %7 = arith.maximumf %5, %6 : vector<8x256xf32>
    %c0_6 = arith.constant 0 : index
    %c0_7 = arith.constant 0 : index
    %8 = vector.load %arg4[%c0_6, %c0_7] : memref<1x256xf32, #tpu.memory_space<vmem>>, vector<1x256xf32>
    %cst_8 = arith.constant dense<0.000000e+00> : vector<1x8xf32>
    %9 = tpu.matmul %8, %7, %cst_8 {dimension_numbers = #tpu.dot_dimension_numbers<[1], [1], [0], [0], [0, 0, 1, 0], [], []>} : vector<1x256xf32>, vector<8x256xf32>, vector<1x8xf32> -> vector<1x8xf32>
    %c0_9 = arith.constant 0 : index
    %c0_10 = arith.constant 0 : index
    %10 = vector.load %arg5[%c0_9, %c0_10] : memref<1x1xf32, #tpu.memory_space<vmem>>, vector<1x1xf32>
    %11 = vector.broadcast %10 : vector<1x1xf32> to vector<1x8xf32>
    %12 = arith.addf %9, %11 : vector<1x8xf32>
    %cst_11 = arith.constant 0.000000e+00 : f32
    %13 = vector.broadcast %cst_11 : f32 to vector<1x8xf32>
    %14 = arith.subf %13, %12 : vector<1x8xf32>
    %15 = math.exp %14 : vector<1x8xf32>
    %cst_12 = arith.constant 1.000000e+00 : f32
    %16 = vector.broadcast %cst_12 : f32 to vector<1x8xf32>
    %17 = arith.addf %16, %15 : vector<1x8xf32>
    %cst_13 = arith.constant 1.000000e+00 : f32
    %18 = vector.broadcast %cst_13 : f32 to vector<1x8xf32>
    %19 = arith.divf %18, %17 : vector<1x8xf32>
    %c0_14 = arith.constant 0 : index
    %c0_15 = arith.constant 0 : index
    %20 = vector.load %arg6[%c0_14, %c0_15] : memref<1x8xf32, #tpu.memory_space<vmem>>, vector<1x8xf32>
    tpu.vector_store %arg6[%c0_14, %c0_15], %19 {strides = array<i32>} : memref<1x8xf32, #tpu.memory_space<vmem>>, vector<1x8xf32>,
    return
  }
  func.func @transform_0(%arg0: i32) -> (i32, i32) {
    %c0_i32 = arith.constant 0 : i32
    %c0_i32_0 = arith.constant 0 : i32
    return %arg0, %c0_i32 : i32, i32
  }
  func.func @transform_1(%arg0: i32) -> (i32, i32) {
    %c0_i32 = arith.constant 0 : i32
    %c0_i32_0 = arith.constant 0 : i32
    %c0_i32_1 = arith.constant 0 : i32
    return %c0_i32, %c0_i32_0 : i32, i32
  }
  func.func @transform_2(%arg0: i32) -> (i32, i32) {
    %c0_i32 = arith.constant 0 : i32
    %c0_i32_0 = arith.constant 0 : i32
    %c0_i32_1 = arith.constant 0 : i32
    return %c0_i32, %c0_i32_0 : i32, i32
  }
  func.func @transform_3(%arg0: i32) -> (i32, i32) {
    %c0_i32 = arith.constant 0 : i32
    %c0_i32_0 = arith.constant 0 : i32
    %c0_i32_1 = arith.constant 0 : i32
    return %c0_i32, %c0_i32_0 : i32, i32
  }
  func.func @transform_4(%arg0: i32) -> (i32, i32) {
    %c0_i32 = arith.constant 0 : i32
    %c0_i32_0 = arith.constant 0 : i32
    %c0_i32_1 = arith.constant 0 : i32
    return %c0_i32, %c0_i32_0 : i32, i32
  }
  func.func @transform_5(%arg0: i32) -> (i32, i32) {
    %c0_i32 = arith.constant 0 : i32
    %c0_i32_0 = arith.constant 0 : i32
    return %c0_i32, %arg0 : i32, i32
  }
}

</mosaic_0001>

<llo_original>
// kernel: tpu_custom_call.1
$region0: #{tpu_custom_call.1}
  #allocation0 [shape = 'u32[]', space=smem, size = 0x4, offset = 0x4, fixed_abs, tag = 'smem constant byte address 0x4 - core index']
  #allocation1 [shape = 'u32[144,128]{1,0:T(1,128)}', space=vmem, size = 0x12000, scoped, tag = 'internal scratch']
  #allocation2 [shape = 'f32[1,1]{1,0:T(1,128)S(1)}', space=vmem, size = 0x200, scoped, tag = 'scoped memory for tpu_custom_call.1']
  %s0 = inlined_call_operand.vmem [shape: f32[8,4], index: 0, kind: input, shape index: {}]
  %s1 = inlined_call_operand.vmem [shape: f32[4,256], index: 1, kind: input, shape index: {}]
  %s2 = inlined_call_operand.vmem [shape: f32[1,256], index: 2, kind: input, shape index: {}]
  %s3 = inlined_call_operand.vmem [shape: f32[1,256], index: 3, kind: input, shape index: {}]
  %s4 = inlined_call_operand.<no memory space> [shape: f32[1,1], index: 4, kind: input, shape index: {}]
  %s5 = inlined_call_operand.hbm [shape: f32[1,8], index: 5, kind: output, shape index: {}]
  %s6 = sld [smem:[#allocation0]]
  $region30: #{tpu_custom_call.1} parent=0
    _
  %s8 = ssub.s32 1, %s6
  %s9 = scalar_select 0, %s8, %s6
  %v10 = vstv %s4
  %11 = vst [vmem:[#allocation2] sm:$0x1] %v10
  $region1: #{tpu_custom_call.1} parent=0
    #allocation3 [shape = 'u8[512]{0}', space=vmem, size = 0x400, scoped, tag = 'output window, operand 0, single buffered']
    #allocation4 [shape = 's32[1]{0}', space=sflag, size = 0x4, scoped, tag = 'scoped memory for tpu_custom_call.1']
    %12 = vsyncpa [#allocation4], 0
    // Predicated region
    $region2: #{tpu_custom_call.1} parent=1 // pred_check
      _
    $region3: #{tpu_custom_call.1} parent=1 // pred_check_branch
      %14 = sbr.rel (0) target = $region5
    $region4: #{tpu_custom_call.1} parent=1 // pred_region
      _
    $region5: #{tpu_custom_call.1} parent=1 // pred_fallthru
      _
    // Predicated region
    $region6: #{tpu_custom_call.1} parent=1 // pred_check
      _
    $region7: #{tpu_custom_call.1} parent=1 // pred_check_branch
      %16 = sbr.rel (0) target = $region9
    $region8: #{tpu_custom_call.1} parent=1 // pred_region
      _
    $region9: #{tpu_custom_call.1} parent=1 // pred_fallthru
      _
    // Predicated region
    $region10: #{tpu_custom_call.1} parent=1 // pred_check
      _
    $region11: #{tpu_custom_call.1} parent=1 // pred_check_branch
      %18 = sbr.rel (0) target = $region13
    $region12: #{tpu_custom_call.1} parent=1 // pred_region
      _
    $region13: #{tpu_custom_call.1} parent=1 // pred_fallthru
      _
    // Predicated region
    $region14: #{tpu_custom_call.1} parent=1 // pred_check
      _
    $region15: #{tpu_custom_call.1} parent=1 // pred_check_branch
      %20 = sbr.rel (0) target = $region17
    $region16: #{tpu_custom_call.1} parent=1 // pred_region
      _
    $region17: #{tpu_custom_call.1} parent=1 // pred_fallthru
      _
    // Predicated region
    $region18: #{tpu_custom_call.1} parent=1 // pred_check
      _
    $region19: #{tpu_custom_call.1} parent=1 // pred_check_branch
      %22 = sbr.rel (0) target = $region21
    $region20: #{tpu_custom_call.1} parent=1 // pred_region
      _
    $region21: #{tpu_custom_call.1} parent=1 // pred_fallthru
      _
    %v23 = vld [vmem:[%s0] sm:$0xff]
    %v24 = vld [vmem:[%s1] sm:$0xff]
    %v25 = vld [vmem:[%s2] sm:$0x3]
    %v27 = vlaneseq
    %v28 = vshrl.u32 %v27, 7
    %v29 = vsub.s32 0, %v28
    %v30 = vrot.slane %v25, %v29
    %v31 = vlaneseq
    %v32 = vshrl.u32 %v31, 7
    %v33 = vsub.s32 1, %v32
    %v34 = vrot.slane %v25, %v33
    %v38 = vcombine.high %v24, %v24
    %vm39 = vcmask 31744
    %v41 = vsel %vm39, %v23, 0
    %vm43 = vcmask 1043456
    %v44 = vsel %vm43, %v24, 0
    %v46 = vsel %vm43, %v38, 0
    %48 = vmatprep.subr.mxu0 %v46
    %49 = vmatpush1.msra.mxu0 %v44
    %50 = vmatprep.subr.mxu0 0.0
    %51 = vmatpush1.msra.mxu0 0.0
    %52 = vmatprep.subr.mxu0 0.0
    %53 = vmatpush1.msra.mxu0 0.0
    %54 = vmatprep.subr.mxu0 0.0
    %55 = vmatpush1.msra.mxu0 0.0
    %56 = vmatprep.subr.mxu0 0.0
    %57 = vmatpush1.msra.mxu0 0.0
    %58 = vmatprep.subr.mxu0 0.0
    %59 = vmatpush1.msra.mxu0 0.0
    %60 = vmatprep.subr.mxu0 0.0
    %61 = vmatpush1.msra.mxu0 0.0
    %62 = vmatprep.subr.mxu0 0.0
    %63 = vmatpush1.msra.mxu0 0.0
    %64 = vmatprep.subr.mxu0 0.0
    %65 = vmatpush1.msra.mxu0 0.0
    %66 = vmatprep.subr.mxu0 0.0
    %67 = vmatpush1.msra.mxu0 0.0
    %68 = vmatprep.subr.mxu0 0.0
    %69 = vmatpush1.msra.mxu0 0.0
    %70 = vmatprep.subr.mxu0 0.0
    %71 = vmatpush1.msra.mxu0 0.0
    %72 = vmatprep.subr.mxu0 0.0
    %73 = vmatpush1.msra.mxu0 0.0
    %74 = vmatprep.subr.mxu0 0.0
    %75 = vmatpush1.msra.mxu0 0.0
    %76 = vmatprep.subr.mxu0 0.0
    %77 = vmatpush1.msra.mxu0 0.0
    %78 = vmatprep.subr.mxu0 0.0
    %79 = vmatpush1.msra.mxu0 0.0
    %80 = vmatprep.subr.mxu0 0.0
    %81 = vmatpush1.msra.mxu0 0.0
    %82 = vmatprep.subr.mxu0 0.0
    %83 = vmatpush1.msra.mxu0 0.0
    %84 = vmatprep.subr.mxu0 0.0
    %85 = vmatpush1.msra.mxu0 0.0
    %86 = vmatprep.subr.mxu0 0.0
    %87 = vmatpush1.msra.mxu0 0.0
    %88 = vmatprep.subr.mxu0 0.0
    %89 = vmatpush1.msra.mxu0 0.0
    %90 = vmatprep.subr.mxu0 0.0
    %91 = vmatpush1.msra.mxu0 0.0
    %92 = vmatprep.subr.mxu0 0.0
    %93 = vmatpush1.msra.mxu0 0.0
    %94 = vmatprep.subr.mxu0 0.0
    %95 = vmatpush1.msra.mxu0 0.0
    %96 = vmatprep.subr.mxu0 0.0
    %97 = vmatpush1.msra.mxu0 0.0
    %98 = vmatprep.subr.mxu0 0.0
    %99 = vmatpush1.msra.mxu0 0.0
    %100 = vmatprep.subr.mxu0 0.0
    %101 = vmatpush1.msra.mxu0 0.0
    %102 = vmatprep.subr.mxu0 0.0
    %103 = vmatpush1.msra.mxu0 0.0
    %104 = vmatprep.subr.mxu0 0.0
    %105 = vmatpush1.msra.mxu0 0.0
    %106 = vmatprep.subr.mxu0 0.0
    %107 = vmatpush1.msra.mxu0 0.0
    %108 = vmatprep.subr.mxu0 0.0
    %109 = vmatpush1.msra.mxu0 0.0
    %110 = vmatprep.subr.mxu0 0.0
    %111 = vmatpush1.msra.mxu0 0.0
    %112 = vmatprep.mubr.f32.mxu0 0.0
    %113 = vmatmul.mubr.f32.gmra.mrb[0].mxu0 %v41
    %v114 = vpop.f32.mrb[0].mxu0
    %v115 = vadd.f32 %v30, %v114
    %v116 = vpop.f32.mrb[0].mxu0
    %v117 = vadd.f32 %v34, %v116
    %118 = vdwg.mxu0
    %v119 = vmax.f32 %v115, 0.0
    %v120 = vmax.f32 %v117, 0.0
    %v121 = vld [vmem:[%s3] sm:$0x3]
    %v122 = vld [vmem:[#allocation2] sm:$0x1]
    %124 = vset.pattern.permute.xlu0 0
    %125 = vperm.xlu0 %124, %v122
    %v126 = vpop.permute.xlu0 %125
    %v128 = vlaneseq
    %v129 = vshrl.u32 %v128, 7
    %v130 = vsub.s32 0, %v129
    %v131 = vrot.slane %v126, %v130
    %v133 = vlaneseq
    %v134 = vshrl.u32 %v133, 7
    %v135 = vsub.s32 0, %v134
    %v136 = vrot.slane %v121, %v135
    %v137 = vlaneseq
    %v138 = vshrl.u32 %v137, 7
    %v139 = vsub.s32 1, %v138
    %v140 = vrot.slane %v121, %v139
    %143 = vmatprep.subr.mxu0 %v120
    %144 = vmatpush1.xpose.msra.mxu0 %v119
    %145 = vmatprep.subr.mxu0 0.0
    %146 = vmatpush1.xpose.msra.mxu0 0.0
    %147 = vmatprep.subr.mxu0 0.0
    %148 = vmatpush1.xpose.msra.mxu0 0.0
    %149 = vmatprep.subr.mxu0 0.0
    %150 = vmatpush1.xpose.msra.mxu0 0.0
    %151 = vmatprep.subr.mxu0 0.0
    %152 = vmatpush1.xpose.msra.mxu0 0.0
    %153 = vmatprep.subr.mxu0 0.0
    %154 = vmatpush1.xpose.msra.mxu0 0.0
    %155 = vmatprep.subr.mxu0 0.0
    %156 = vmatpush1.xpose.msra.mxu0 0.0
    %157 = vmatprep.subr.mxu0 0.0
    %158 = vmatpush1.xpose.msra.mxu0 0.0
    %159 = vmatprep.subr.mxu0 0.0
    %160 = vmatpush1.xpose.msra.mxu0 0.0
    %161 = vmatprep.subr.mxu0 0.0
    %162 = vmatpush1.xpose.msra.mxu0 0.0
    %163 = vmatprep.subr.mxu0 0.0
    %164 = vmatpush1.xpose.msra.mxu0 0.0
    %165 = vmatprep.subr.mxu0 0.0
    %166 = vmatpush1.xpose.msra.mxu0 0.0
    %167 = vmatprep.subr.mxu0 0.0
    %168 = vmatpush1.xpose.msra.mxu0 0.0
    %169 = vmatprep.subr.mxu0 0.0
    %170 = vmatpush1.xpose.msra.mxu0 0.0
    %171 = vmatprep.subr.mxu0 0.0
    %172 = vmatpush1.xpose.msra.mxu0 0.0
    %173 = vmatprep.subr.mxu0 0.0
    %174 = vmatpush1.xpose.msra.mxu0 0.0
    %175 = vmatprep.subr.mxu0 0.0
    %176 = vmatpush1.xpose.msra.mxu0 0.0
    %177 = vmatprep.subr.mxu0 0.0
    %178 = vmatpush1.xpose.msra.mxu0 0.0
    %179 = vmatprep.subr.mxu0 0.0
    %180 = vmatpush1.xpose.msra.mxu0 0.0
    %181 = vmatprep.subr.mxu0 0.0
    %182 = vmatpush1.xpose.msra.mxu0 0.0
    %183 = vmatprep.subr.mxu0 0.0
    %184 = vmatpush1.xpose.msra.mxu0 0.0
    %185 = vmatprep.subr.mxu0 0.0
    %186 = vmatpush1.xpose.msra.mxu0 0.0
    %187 = vmatprep.subr.mxu0 0.0
    %188 = vmatpush1.xpose.msra.mxu0 0.0
    %189 = vmatprep.subr.mxu0 0.0
    %190 = vmatpush1.xpose.msra.mxu0 0.0
    %191 = vmatprep.subr.mxu0 0.0
    %192 = vmatpush1.xpose.msra.mxu0 0.0
    %193 = vmatprep.subr.mxu0 0.0
    %194 = vmatpush1.xpose.msra.mxu0 0.0
    %195 = vmatprep.subr.mxu0 0.0
    %196 = vmatpush1.xpose.msra.mxu0 0.0
    %197 = vmatprep.subr.mxu0 0.0
    %198 = vmatpush1.xpose.msra.mxu0 0.0
    %199 = vmatprep.subr.mxu0 0.0
    %200 = vmatpush1.xpose.msra.mxu0 0.0
    %201 = vmatprep.subr.mxu0 0.0
    %202 = vmatpush1.xpose.msra.mxu0 0.0
    %203 = vmatprep.subr.mxu0 0.0
    %204 = vmatpush1.xpose.msra.mxu0 0.0
    %205 = vmatprep.subr.mxu0 0.0
    %206 = vmatpush1.xpose.msra.mxu0 0.0
    %207 = vmatprep.mubr.f32.mxu0 %v140
    %208 = vmatmul.mubr.f32.gmra.mrb[0].mxu0 %v136
    %v209 = vpop.f32.mrb[0].mxu0
    %v210 = vadd.f32 %v131, %v209
    %v211 = vpop.f32.mrb[0].mxu0
    %212 = vdwg.mxu0
    %v213 = vsub.f32 0.0, %v210
    %v214 = vmul.f32 %v213, 1.442695
    %v215 = vpow.pop %v214
    %v216 = vadd.f32 %v215, 1.0
    %v217 = vrcp.pop %v216
    %v218 = vmul.f32 1.0, %v217
    %vm219 = vcmask 57344
    %220 = vst.msk [vmem:[#allocation3] sm:$0x1] %vm219, %v218
    // Predicated region
    $region22: #{tpu_custom_call.1} parent=1 // pred_check
      _
    $region23: #{tpu_custom_call.1} parent=1 // pred_check_branch
      %222 = sbr.rel (0) target = $region25
    $region24: #{tpu_custom_call.1} parent=1 // pred_region
      %s224 = ssub.s32 16, 16
      %225 = vsyncadd [#allocation4], %s224
      %s227 = sshll.u32 [#allocation3], 4
      %s228 = int_to_ptr.vmem [resolvable:$true] %s227
      %230 = dma.vmem_to_hbm [thread:$0]  %s228, 16, %s5, [#allocation4]
    $region25: #{tpu_custom_call.1} parent=1 // pred_fallthru
      _
    // Predicated region
    $region26: #{tpu_custom_call.1} parent=1 // pred_check
      _
    $region27: #{tpu_custom_call.1} parent=1 // pred_check_branch
      %232 = sbr.rel (0) target = $region29
    $region28: #{tpu_custom_call.1} parent=1 // pred_region
      %233 = dma.done [#allocation4], 16
    $region29: #{tpu_custom_call.1} parent=1 // pred_fallthru
      _
    %234 = vsyncpa [#allocation4], 1

</llo_original>
